<compile_context>
chip_gen: v6e
topology: v6e:2x2x1
jax: 0.10.0
libtpu: 0.0.40
codegen_flags: <defaults>
</compile_context>

<pallas_src>
import jax
import jax.numpy as jnp
from jax import lax
from jax.experimental import pallas as pl
from jax.experimental.pallas import tpu as pltpu


def _round_up(x: int, m: int) -> int:
    return ((x + m - 1) // m) * m


def _cdiv(a: int, b: int) -> int:
    return -(-a // b)


def _clamp_cands(cands, max_v):
    out = []
    for c in cands:
        v = min(c, max_v)
        if v not in out:
            out.append(v)
    return out


# ---------------------------------------------------------------------------
# Kernels
# ---------------------------------------------------------------------------
def _pl_kernel_kgrid(off_ref, x_ref, w_ref, b_ref, o_ref, acc_ref):
    """grid = (M/tm, N/tn, K/tk); f32 accumulator, bias + cast in epilogue.

    off_ref : SMEM scalar prefetch (vocab row-block offset) -- index_maps only.
    x_ref   : [tm, tk] activations
    w_ref   : [tn, tk] weight rows (natural [N, D] layout -- no transpose)
    b_ref   : [1, tn]  bias tile (f32)
    o_ref   : [tm, tn] output tile
    acc_ref : [tm, tn] f32 accumulator scratch
    """
    del off_ref
    k = pl.program_id(2)

    @pl.when(k == 0)
    def _init():
        acc_ref[...] = jnp.zeros_like(acc_ref)

    x = x_ref[...]
    w = w_ref[...]
    if w.dtype != x.dtype:
        w = w.astype(x.dtype)  # on-chip cast of the (tn, tk) tile only
    # Contract last dim of x with last dim of w -> [tm, tn] on the MXU.
    acc_ref[...] += lax.dot_general(
        x, w, dimension_numbers=(((1,), (1,)), ((), ())),
        preferred_element_type=jnp.float32)

    @pl.when(k == pl.num_programs(2) - 1)
    def _epilogue():
        o_ref[...] = (acc_ref[...] + b_ref[...]).astype(o_ref.dtype)


def _pl_kernel_fullk(off_ref, x_ref, w_ref, b_ref, o_ref):
    """grid = (M/tm, N/tn); full-K tiles -> no scratch, no epilogue copy."""
    del off_ref
    x = x_ref[...]
    w = w_ref[...]
    if w.dtype != x.dtype:
        w = w.astype(x.dtype)
    acc = lax.dot_general(
        x, w, dimension_numbers=(((1,), (1,)), ((), ())),
        preferred_element_type=jnp.float32)
    o_ref[...] = (acc + b_ref[...]).astype(o_ref.dtype)


# ---------------------------------------------------------------------------
# Tile selection
# ---------------------------------------------------------------------------
def _select_tiles(m, n_hint, d, x_isz, w_isz, out_isz):
    """VMEM-capacity-driven tile selection (generation aware)."""
    try:
        info = pltpu.get_tpu_info()
        vmem_cap = int(getattr(info, "vmem_capacity_bytes", 0)) or (64 << 20)
    except Exception:
        vmem_cap = 64 << 20  # conservative (v7x-sized) fallback

    # Working-set budget well under per-core VMEM so double-buffering has
    # headroom: v5e/v6e (128 MiB) -> <=56 MiB, v7x (64 MiB) -> ~28 MiB.
    budget = min(int(vmem_cap * 0.45), 56 << 20)

    # Sublane packing of the activation dtype (16 for bf16, 32 for 8-bit).
    pack_m = 8 if x_isz >= 4 else (16 if x_isz == 2 else 32)
    tm_max = _round_up(min(max(m, 1), 2048), pack_m)
    tn_max = max(128, _round_up(min(max(n_hint, 1), 2048), 128))

    # K tile: largest lane-aligned divisor of d (capped); otherwise full d
    # (odd hidden sizes never silently blow the VMEM budget -- the tm/tn
    # search below sees the real tk footprint).
    tk_cap = 1024 if max(x_isz, w_isz) <= 2 else 512
    tk = d
    if d % 128 == 0:
        c = min(tk_cap, d)
        c -= c % 128
        while c >= 128:
            if d % c == 0:
                tk = c
                break
            c -= 128

    def footprint(tm, tn, tk_, with_acc):
        fp = 2 * tm * tk_ * x_isz        # x, double-buffered
        fp += 2 * tn * tk_ * w_isz       # weight rows, double-buffered
        fp += 2 * 8 * tn * 4             # bias tile (sublane-padded), f32
        fp += 2 * tm * tn * out_isz      # output, double-buffered
        if with_acc:
            fp += tm * tn * 4            # f32 accumulator scratch
        return fp

    cands = [2048, 1024, 512, 256, 128]
    tm_cands = _clamp_cands(cands, tm_max)
    tn_cands = _clamp_cands(cands, tn_max)

    best = None
    for tm in tm_cands:
        for tn in tn_cands:
            if footprint(tm, tn, tk, tk != d) > budget:
                continue
            # Arithmetic intensity ~ tm*tn/(tm+tn); prefer smaller tn on ties
            # so the vocab axis keeps >=2 blocks for megacore sharding.
            key = ((tm * tn) / (tm + tn), tm * tn, tm)
            if best is None or key > best[0]:
                best = (key, tm, tn)
    if best is None:
        tm, tn = tm_cands[-1], tn_cands[-1]
    else:
        _, tm, tn = best

    single_k = tk == d
    if not single_k and footprint(tm, tn, d, False) <= budget:
        # Full-K tiles fit: drop the K grid axis -- x streamed once, no acc.
        single_k = True
        tk = d

    fp = footprint(tm, tn, tk, not single_k)
    vmem_limit = min(max(32 << 20, fp + (8 << 20)), int(vmem_cap * 0.9))
    return tm, tn, tk, single_k, int(vmem_limit)


# ---------------------------------------------------------------------------
# Wrapper
# ---------------------------------------------------------------------------
def _matmul_bias_rows(x2d, weight, bias, row_start, row_count,
                      compute_dtype=None, _force_multi_k_tk=None):
    """out = x2d @ weight[row_start:row_start+row_count].T + bias[rows].

    x2d: [M, D], weight: [V, D], bias: [V]  ->  [M, row_count]
    """
    M, D = x2d.shape
    V, D2 = weight.shape
    assert D == D2
    assert 0 <= row_start and row_count > 0 and row_start + row_count <= V
    out_dtype = x2d.dtype

    if compute_dtype is not None:
        # Only the (small) activations are cast in the wrapper; the weight
        # tile is cast on-chip.  Pass the lm_head weight already in bf16 to
        # also halve its (dominant) HBM stream.
        x2d = x2d.astype(compute_dtype)

    x_isz = jnp.dtype(x2d.dtype).itemsize
    w_isz = jnp.dtype(weight.dtype).itemsize
    out_isz = jnp.dtype(out_dtype).itemsize

    tm, tn, tk, single_k, vmem_limit = _select_tiles(
        M, row_count, D, x_isz, w_isz, out_isz)

    # Test-only knob to exercise the K-grid accumulator kernel at small D.
    if (_force_multi_k_tk is not None and D % _force_multi_k_tk == 0
            and _force_multi_k_tk % 128 == 0 and _force_multi_k_tk < D):
        tk, single_k = _force_multi_k_tk, False

    # Row subset with zero weight copies: align the subset start down to a
    # tile boundary and index rows straight out of the full weight via a
    # scalar-prefetched block offset.  Extra leading columns and any ragged
    # tail past V (boundary-clamped blocks) are sliced off the result.
    aligned_start = (row_start // tn) * tn
    extra = row_start - aligned_start
    n_blocks = _cdiv(extra + row_count, tn)
    grid_m = _cdiv(M, tm)
    m_pad, n_pad = grid_m * tm, n_blocks * tn

    bias2d = bias.reshape(1, V).astype(jnp.float32)
    off_arr = jnp.array([aligned_start // tn], dtype=jnp.int32)

    if single_k:
        kernel = _pl_kernel_fullk
        grid = (grid_m, n_blocks)
        in_specs = [
            pl.BlockSpec((tm, D), lambda i, j, off: (i, 0)),
            pl.BlockSpec((tn, D), lambda i, j, off: (off[0] + j, 0)),
            pl.BlockSpec((1, tn), lambda i, j, off: (0, off[0] + j)),
        ]
        out_specs = pl.BlockSpec((tm, tn), lambda i, j, off: (i, j))
        scratch_shapes = ()
        dim_sem = ("parallel", "parallel")
    else:
        kernel = _pl_kernel_kgrid
        grid = (grid_m, n_blocks, D // tk)
        in_specs = [
            pl.BlockSpec((tm, tk), lambda i, j, k, off: (i, k)),
            pl.BlockSpec((tn, tk), lambda i, j, k, off: (off[0] + j, k)),
            pl.BlockSpec((1, tn), lambda i, j, k, off: (0, off[0] + j)),
        ]
        out_specs = pl.BlockSpec((tm, tn), lambda i, j, k, off: (i, j))
        scratch_shapes = (pltpu.VMEM((tm, tn), jnp.float32),)
        dim_sem = ("parallel", "parallel", "arbitrary")

    out = pl.pallas_call(
        kernel,
        out_shape=jax.ShapeDtypeStruct((m_pad, n_pad), out_dtype),
        grid_spec=pltpu.PrefetchScalarGridSpec(
            num_scalar_prefetch=1,
            grid=grid,
            in_specs=in_specs,
            out_specs=out_specs,
            scratch_shapes=scratch_shapes,
        ),
        compiler_params=pltpu.CompilerParams(
            dimension_semantics=dim_sem,
            vmem_limit_bytes=vmem_limit,
        ),
    )(off_arr, x2d, weight, bias2d)

    return out[:M, extra:extra + row_count]


def partial_linear_forward(
    x: jax.Array,
    weight: jax.Array,
    bias,
    subset_start: int,
    subset_end: int,
    training: bool = True,
    compute_dtype=None,
    _force_multi_k_tk=None,
) -> jax.Array:
    """JAX/Pallas equivalent of PartialLinear.forward.

    x: [batch, seq, in_features]; weight: [vocab, in_features]; bias: [vocab].
    Training -> logits over [subset_start, subset_end); inference -> full vocab.
    """
    B, S, D = x.shape
    V = weight.shape[0]
    if bias is None:
        bias = jnp.zeros((V,), dtype=jnp.float32)

    x2d = x.reshape(B * S, D)
    if training:
        out2d = _matmul_bias_rows(
            x2d, weight, bias, subset_start, subset_end - subset_start,
            compute_dtype=compute_dtype, _force_multi_k_tk=_force_multi_k_tk)
    else:
        out2d = _matmul_bias_rows(
            x2d, weight, bias, 0, V,
            compute_dtype=compute_dtype, _force_multi_k_tk=_force_multi_k_tk)
    return out2d.reshape(B, S, -1)


if __name__ == "__main__":
    key = jax.random.PRNGKey(0)
    k_x, k_w, k_b, k_w2, k_b2, k_x3, k_w3, k_b3 = jax.random.split(key, 8)

    batch, seq, hidden = 2, 8, 32
    vocab = 64
    subset_start, subset_end = 16, 48   # unaligned subset start

    x = jax.random.normal(k_x, (batch, seq, hidden), dtype=jnp.float32)
    weight = jax.random.normal(k_w, (vocab, hidden), dtype=jnp.float32) * 0.02
    bias = jax.random.normal(k_b, (vocab,), dtype=jnp.float32) * 0.02

    # Training path: logits over the vocabulary subset.
    logits_subset = partial_linear_forward(
        x, weight, bias, subset_start, subset_end, training=True)
    jax.block_until_ready(logits_subset)
    ref_subset = (jnp.einsum("bsd,vd->bsv", x, weight[subset_start:subset_end])
                  + bias[subset_start:subset_end])
    assert logits_subset.shape == (batch, seq, subset_end - subset_start)
    assert jnp.allclose(logits_subset, ref_subset, atol=1e-4, rtol=1e-4)

    # Inference path: logits over the full vocabulary (original_linear(x)).
    logits_full = partial_linear_forward(
        x, weight, bias, subset_start, subset_end, training=False)
    jax.block_until_ready(logits_full)
    ref_full = jnp.einsum("bsd,vd->bsv", x, weight) + bias
    assert logits_full.shape == (batch, seq, vocab)
    assert jnp.allclose(logits_full, ref_full, atol=1e-4, rtol=1e-4)

    # Tile-aligned subset of a larger vocab (pure block-offset indexing).
    vocab2 = 256
    weight2 = jax.random.normal(k_w2, (vocab2, hidden), dtype=jnp.float32) * 0.02
    bias2 = jax.random.normal(k_b2, (vocab2,), dtype=jnp.float32) * 0.02
    logits_aligned = partial_linear_forward(
        x, weight2, bias2, 128, 256, training=True)
    jax.block_until_ready(logits_aligned)
    ref_aligned = jnp.einsum("bsd,vd->bsv", x, weight2[128:256]) + bias2[128:256]
    assert jnp.allclose(logits_aligned, ref_aligned, atol=1e-4, rtol=1e-4)

    # bf16 operands on the MXU (activations cast in wrapper, weight tile
    # cast on-chip; f32 accumulation kept) -- loose tolerance.
    logits_bf16 = partial_linear_forward(
        x, weight, bias, subset_start, subset_end, training=True,
        compute_dtype=jnp.bfloat16)
    jax.block_until_ready(logits_bf16)
    assert jnp.allclose(logits_bf16.astype(jnp.float32), ref_subset,
                        atol=5e-2, rtol=5e-2)

    # Explicitly exercise the K-grid (f32 accumulator) kernel.
    hidden2, vocab3 = 256, 128
    x3 = jax.random.normal(k_x3, (batch, seq, hidden2), dtype=jnp.float32)
    weight3 = jax.random.normal(k_w3, (vocab3, hidden2), dtype=jnp.float32) * 0.02
    bias3 = jax.random.normal(k_b3, (vocab3,), dtype=jnp.float32) * 0.02
    logits_mk = partial_linear_forward(
        x3, weight3, bias3, 0, vocab3, training=True, _force_multi_k_tk=128)
    jax.block_until_ready(logits_mk)
    ref_mk = jnp.einsum("bsd,vd->bsv", x3, weight3) + bias3
    assert jnp.allclose(logits_mk, ref_mk, atol=1e-2, rtol=1e-2)

    print("KERNEL_OK")
</pallas_src>

<mosaic_0001>
module attributes {stable_mosaic.version = 11 : i64} {
  func.func @_pl_kernel_fullk(%arg0: i32, %arg1: i32, %arg2: memref<1xi32, #tpu.memory_space<smem>>, %arg3: memref<16x32xf32, #tpu.memory_space<vmem>>, %arg4: memref<128x32xf32, #tpu.memory_space<vmem>>, %arg5: memref<1x128xf32, #tpu.memory_space<vmem>>, %arg6: memref<16x128xf32, #tpu.memory_space<vmem>>) attributes {dimension_semantics = [#tpu.dimension_semantics<parallel>, #tpu.dimension_semantics<parallel>], iteration_bounds = array<i64: 1, 1>, scalar_prefetch = 1 : i64, scratch_operands = 0 : i64, tpu.core_type = #tpu.core_type<tc>, window_params = [{transform_indices = @transform_0, window_bounds = array<i64: 16, 32>}, {transform_indices = @transform_1, window_bounds = array<i64: 128, 32>}, {transform_indices = @transform_2, window_bounds = array<i64: 1, 128>}, {transform_indices = @transform_3, window_bounds = array<i64: 16, 128>}]} {
    %c0 = arith.constant 0 : index
    %c0_0 = arith.constant 0 : index
    %0 = vector.load %arg3[%c0, %c0_0] : memref<16x32xf32, #tpu.memory_space<vmem>>, vector<16x32xf32>
    %c0_1 = arith.constant 0 : index
    %c0_2 = arith.constant 0 : index
    %1 = vector.load %arg4[%c0_1, %c0_2] : memref<128x32xf32, #tpu.memory_space<vmem>>, vector<128x32xf32>
    %cst = arith.constant dense<0.000000e+00> : vector<16x128xf32>
    %2 = tpu.matmul %0, %1, %cst {dimension_numbers = #tpu.dot_dimension_numbers<[1], [1], [0], [0], [0, 0, 1, 0], [], []>} : vector<16x32xf32>, vector<128x32xf32>, vector<16x128xf32> -> vector<16x128xf32>
    %c0_3 = arith.constant 0 : index
    %c0_4 = arith.constant 0 : index
    %3 = vector.load %arg5[%c0_3, %c0_4] : memref<1x128xf32, #tpu.memory_space<vmem>>, vector<1x128xf32>
    %4 = vector.broadcast %3 : vector<1x128xf32> to vector<16x128xf32>
    %5 = arith.addf %2, %4 : vector<16x128xf32>
    %c0_5 = arith.constant 0 : index
    %c0_6 = arith.constant 0 : index
    %6 = vector.load %arg6[%c0_5, %c0_6] : memref<16x128xf32, #tpu.memory_space<vmem>>, vector<16x128xf32>
    tpu.vector_store %arg6[%c0_5, %c0_6], %5 {strides = array<i32>} : memref<16x128xf32, #tpu.memory_space<vmem>>, vector<16x128xf32>,
    return
  }
  func.func @transform_0(%arg0: i32, %arg1: i32, %arg2: memref<1xi32, #tpu.memory_space<smem>>) -> (i32, i32) {
    %c0_i32 = arith.constant 0 : i32
    %c0_i32_0 = arith.constant 0 : i32
    return %arg0, %c0_i32 : i32, i32
  }
  func.func @transform_1(%arg0: i32, %arg1: i32, %arg2: memref<1xi32, #tpu.memory_space<smem>>) -> (i32, i32) {
    %c0 = arith.constant 0 : index
    %0 = memref.load %arg2[%c0] : memref<1xi32, #tpu.memory_space<smem>>
    %1 = arith.addi %0, %arg1 : i32
    %c0_i32 = arith.constant 0 : i32
    %c0_i32_0 = arith.constant 0 : i32
    return %1, %c0_i32 : i32, i32
  }
  func.func @transform_2(%arg0: i32, %arg1: i32, %arg2: memref<1xi32, #tpu.memory_space<smem>>) -> (i32, i32) {
    %c0 = arith.constant 0 : index
    %0 = memref.load %arg2[%c0] : memref<1xi32, #tpu.memory_space<smem>>
    %1 = arith.addi %0, %arg1 : i32
    %c0_i32 = arith.constant 0 : i32
    %c0_i32_0 = arith.constant 0 : i32
    return %c0_i32, %1 : i32, i32
  }
  func.func @transform_3(%arg0: i32, %arg1: i32, %arg2: memref<1xi32, #tpu.memory_space<smem>>) -> (i32, i32) {
    %c0_i32 = arith.constant 0 : i32
    return %arg0, %arg1 : i32, i32
  }
}

</mosaic_0001>

<llo_original>
// kernel: tpu_custom_call.1
$region0: #{tpu_custom_call.1}
  #allocation0 [shape = 'u32[]', space=smem, size = 0x4, offset = 0x4, fixed_abs, tag = 'smem constant byte address 0x4 - core index']
  #allocation1 [shape = 'u32[144,128]{1,0:T(1,128)}', space=vmem, size = 0x12000, scoped, tag = 'internal scratch']
  #allocation2 [shape = 's32[1]{0}', space=sflag, size = 0x4, scoped, tag = 'scoped memory for tpu_custom_call.1']
  #allocation3 [shape = 's32[1]{0:T(128)S(6)}', space=smem, size = 0x200, scoped, tag = 'prefetched SMEM operand 0']
  %s0 = inlined_call_operand.<no memory space> [shape: s32[1], index: 0, kind: input, shape index: {}]
  %s1 = inlined_call_operand.vmem [shape: f32[16,32], index: 1, kind: input, shape index: {}]
  %s2 = inlined_call_operand.vmem [shape: f32[64,32], index: 2, kind: input, shape index: {}]
  %s3 = inlined_call_operand.vmem [shape: f32[1,64], index: 3, kind: input, shape index: {}]
  %s4 = inlined_call_operand.hbm [shape: f32[16,128], index: 4, kind: output, shape index: {}]
  %s5 = sld [smem:[#allocation0]]
  $region22: #{tpu_custom_call.1} parent=0
    _
  %s7 = ssub.s32 1, %s5
  %s8 = scalar_select 0, %s7, %s5
  %9 = sst [smem:[#allocation3]] %s0
  $region1: #{tpu_custom_call.1} parent=0
    #allocation4 [shape = 'u8[8192]{0}', space=vmem, size = 0x2000, scoped, tag = 'output window, operand 0, single buffered']
    #allocation5 [shape = 's32[1]{0}', space=sflag, size = 0x4, scoped, tag = 'scoped memory for tpu_custom_call.1']
    %10 = vsyncpa [#allocation5], 0
    // Predicated region
    $region2: #{tpu_custom_call.1} parent=1 // pred_check
      _
    $region3: #{tpu_custom_call.1} parent=1 // pred_check_branch
      %12 = sbr.rel (0) target = $region5
    $region4: #{tpu_custom_call.1} parent=1 // pred_region
      _
    $region5: #{tpu_custom_call.1} parent=1 // pred_fallthru
      _
    // Predicated region
    $region6: #{tpu_custom_call.1} parent=1 // pred_check
      _
    $region7: #{tpu_custom_call.1} parent=1 // pred_check_branch
      %14 = sbr.rel (0) target = $region9
    $region8: #{tpu_custom_call.1} parent=1 // pred_region
      %s15 = sld [smem:[#allocation3]]
      %s16 = sadd.s32 %s15, 0
      %s17 = smul.u32 16, %s16
      %s18 = ssub.s32 8, %s17
      %s19 = smul.u32 128, %s18
      %p20 = scmp.lt.s32.totalorder %s17, 7
      %s21 = scalar_select %p20, %s17, 7
      %s22 = smul.addr %s21, 8
      %s23 = scalar_lea.vmem %s2, %s22
      %s24 = sld [smem:[#allocation3]]
      %s25 = sadd.s32 %s24, 0
      %s26 = smul.u32 16, %s25
      %s27 = ssub.s32 8, %s26
      %s28 = smul.u32 128, %s27
    $region9: #{tpu_custom_call.1} parent=1 // pred_fallthru
      _
    // Predicated region
    $region10: #{tpu_custom_call.1} parent=1 // pred_check
      _
    $region11: #{tpu_custom_call.1} parent=1 // pred_check_branch
      %30 = sbr.rel (0) target = $region13
    $region12: #{tpu_custom_call.1} parent=1 // pred_region
      %s31 = sld [smem:[#allocation3]]
      %s32 = sadd.s32 %s31, 0
      %p33 = scmp.lt.s32.totalorder %s32, 0
      %s34 = scalar_select %p33, %s32, 0
      %s35 = scalar_lea.vmem %s3, %s34
      %s36 = sld [smem:[#allocation3]]
      %s37 = sadd.s32 %s36, 0
    $region13: #{tpu_custom_call.1} parent=1 // pred_fallthru
      _
    %s38 = sld [smem:[#allocation3]]
    %s39 = sadd.s32 %s38, 0
    %s40 = smul.u32 16, %s39
    %s41 = ssub.s32 8, %s40
    %s42 = smul.u32 128, %s41
    %p43 = scmp.lt.s32.totalorder %s40, 7
    %s44 = scalar_select %p43, %s40, 7
    %s45 = smul.addr %s44, 8
    %s46 = scalar_lea.vmem %s2, %s45
    %s47 = sld [smem:[#allocation3]]
    %s48 = sadd.s32 %s47, 0
    %p49 = scmp.lt.s32.totalorder %s48, 0
    %s50 = scalar_select %p49, %s48, 0
    %s51 = scalar_lea.vmem %s3, %s50
    %s52 = sld [smem:[#allocation3]]
    %s53 = sadd.s32 %s52, 0
    %s54 = smul.u32 16, %s53
    %s55 = ssub.s32 8, %s54
    %s56 = smul.u32 128, %s55
    %p57 = scmp.lt.s32.totalorder %s54, 7
    %s58 = scalar_select %p57, %s54, 7
    %s59 = smul.addr %s58, 8
    %s60 = scalar_lea.vmem %s2, %s59
    %s61 = sld [smem:[#allocation3]]
    %s62 = sadd.s32 %s61, 0
    %s63 = smul.u32 16, %s62
    %s64 = ssub.s32 8, %s63
    %s65 = smul.u32 128, %s64
    %s66 = sld [smem:[#allocation3]]
    %s67 = sadd.s32 %s66, 0
    %p68 = scmp.lt.s32.totalorder %s67, 0
    %s69 = scalar_select %p68, %s67, 0
    %s70 = scalar_lea.vmem %s3, %s69
    %s71 = sld [smem:[#allocation3]]
    %s72 = sadd.s32 %s71, 0
    %v73 = vld [vmem:[%s1] sm:$0xff]
    %v74 = vld [vmem:[%s1 + $0x8] sm:$0xff]
    %v75 = vld [vmem:[%s60] sm:$0xff]
    %v76 = vld [vmem:[%s60 + $0x8] sm:$0xff]
    %v77 = vld [vmem:[%s60 + $0x10] sm:$0xff]
    %v78 = vld [vmem:[%s60 + $0x18] sm:$0xff]
    %v79 = vld [vmem:[%s60 + $0x20] sm:$0xff]
    %v80 = vld [vmem:[%s60 + $0x28] sm:$0xff]
    %v81 = vld [vmem:[%s60 + $0x30] sm:$0xff]
    %v82 = vld [vmem:[%s60 + $0x38] sm:$0xff]
    %v83 = vld [vmem:[%s60 + $0x40] sm:$0xff]
    %v84 = vld [vmem:[%s60 + $0x48] sm:$0xff]
    %v85 = vld [vmem:[%s60 + $0x50] sm:$0xff]
    %v86 = vld [vmem:[%s60 + $0x58] sm:$0xff]
    %v87 = vld [vmem:[%s60 + $0x60] sm:$0xff]
    %v88 = vld [vmem:[%s60 + $0x68] sm:$0xff]
    %v89 = vld [vmem:[%s60 + $0x70] sm:$0xff]
    %v90 = vld [vmem:[%s60 + $0x78] sm:$0xff]
    %v91 = vld [vmem:[%s70] sm:$0x1]
    %v93 = vlaneseq
    %v94 = vshrl.u32 %v93, 7
    %v95 = vsub.s32 0, %v94
    %v96 = vrot.slane %v91, %v95
    %vm98 = vcmask 261120
    %v100 = vsel %vm98, %v73, 0
    %v103 = vsel %vm98, %v74, 0
    %v106 = vsel %vm98, %v75, 0
    %v109 = vsel %vm98, %v76, 0
    %v112 = vsel %vm98, %v77, 0
    %v115 = vsel %vm98, %v78, 0
    %v118 = vsel %vm98, %v79, 0
    %v121 = vsel %vm98, %v80, 0
    %v124 = vsel %vm98, %v81, 0
    %v127 = vsel %vm98, %v82, 0
    %v130 = vsel %vm98, %v83, 0
    %v133 = vsel %vm98, %v84, 0
    %v136 = vsel %vm98, %v85, 0
    %v139 = vsel %vm98, %v86, 0
    %v142 = vsel %vm98, %v87, 0
    %v145 = vsel %vm98, %v88, 0
    %v148 = vsel %vm98, %v89, 0
    %v151 = vsel %vm98, %v90, 0
    %153 = vmatprep.subr.mxu0 0.0
    %154 = vmatpush1.xpose.msra.mxu0 %v151
    %155 = vmatprep.subr.mxu0 0.0
    %156 = vmatpush1.xpose.msra.mxu0 %v148
    %157 = vmatprep.subr.mxu0 0.0
    %158 = vmatpush1.xpose.msra.mxu0 %v145
    %159 = vmatprep.subr.mxu0 0.0
    %160 = vmatpush1.xpose.msra.mxu0 %v142
    %161 = vmatprep.subr.mxu0 0.0
    %162 = vmatpush1.xpose.msra.mxu0 %v139
    %163 = vmatprep.subr.mxu0 0.0
    %164 = vmatpush1.xpose.msra.mxu0 %v136
    %165 = vmatprep.subr.mxu0 0.0
    %166 = vmatpush1.xpose.msra.mxu0 %v133
    %167 = vmatprep.subr.mxu0 0.0
    %168 = vmatpush1.xpose.msra.mxu0 %v130
    %169 = vmatprep.subr.mxu0 0.0
    %170 = vmatpush1.xpose.msra.mxu0 %v127
    %171 = vmatprep.subr.mxu0 0.0
    %172 = vmatpush1.xpose.msra.mxu0 %v124
    %173 = vmatprep.subr.mxu0 0.0
    %174 = vmatpush1.xpose.msra.mxu0 %v121
    %175 = vmatprep.subr.mxu0 0.0
    %176 = vmatpush1.xpose.msra.mxu0 %v118
    %177 = vmatprep.subr.mxu0 0.0
    %178 = vmatpush1.xpose.msra.mxu0 %v115
    %179 = vmatprep.subr.mxu0 0.0
    %180 = vmatpush1.xpose.msra.mxu0 %v112
    %181 = vmatprep.subr.mxu0 0.0
    %182 = vmatpush1.xpose.msra.mxu0 %v109
    %183 = vmatprep.subr.mxu0 0.0
    %184 = vmatpush1.xpose.msra.mxu0 %v106
    %185 = vmatprep.subr.mxu0 0.0
    %186 = vmatpush2.xpose.msra.mxu0 0.0
    %187 = vmatprep.subr.mxu0 0.0
    %188 = vmatpush2.xpose.msra.mxu0 0.0
    %189 = vmatprep.subr.mxu0 0.0
    %190 = vmatpush2.xpose.msra.mxu0 0.0
    %191 = vmatprep.subr.mxu0 0.0
    %192 = vmatpush2.xpose.msra.mxu0 0.0
    %193 = vmatprep.subr.mxu0 0.0
    %194 = vmatpush2.xpose.msra.mxu0 0.0
    %195 = vmatprep.subr.mxu0 0.0
    %196 = vmatpush2.xpose.msra.mxu0 0.0
    %197 = vmatprep.subr.mxu0 0.0
    %198 = vmatpush2.xpose.msra.mxu0 0.0
    %199 = vmatprep.subr.mxu0 0.0
    %200 = vmatpush2.xpose.msra.mxu0 0.0
    %201 = vmatprep.subr.mxu0 0.0
    %202 = vmatpush2.xpose.msra.mxu0 0.0
    %203 = vmatprep.subr.mxu0 0.0
    %204 = vmatpush2.xpose.msra.mxu0 0.0
    %205 = vmatprep.subr.mxu0 0.0
    %206 = vmatpush2.xpose.msra.mxu0 0.0
    %207 = vmatprep.subr.mxu0 0.0
    %208 = vmatpush2.xpose.msra.mxu0 0.0
    %209 = vmatprep.subr.mxu0 0.0
    %210 = vmatpush2.xpose.msra.mxu0 0.0
    %211 = vmatprep.subr.mxu0 0.0
    %212 = vmatpush2.xpose.msra.mxu0 0.0
    %213 = vmatprep.subr.mxu0 0.0
    %214 = vmatpush2.xpose.msra.mxu0 0.0
    %215 = vmatprep.subr.mxu0 0.0
    %216 = vmatpush2.xpose.msra.mxu0 0.0
    %217 = vmatprep.mubr.f32.mxu0 0.0
    %218 = vmatmul.mubr.f32.gmra.mxu0 %v100
    %v219 = vpop.f32.mrf.mxu0
    %v220 = vadd.f32 %v96, %v219
    %v221 = vpop.f32.mrf.mxu0
    %222 = vmatprep.mubr.f32.mxu0 0.0
    %223 = vmatmul.mubr.f32.gmra.mxu0 %v103
    %v224 = vpop.f32.mrf.mxu0
    %v225 = vadd.f32 %v96, %v224
    %v226 = vpop.f32.mrf.mxu0
    %227 = vdwg.mxu0
    %228 = vst [vmem:[#allocation4] sm:$0xff] %v220
    %229 = vst [vmem:[#allocation4 + $0x8] sm:$0xff] %v225
    // Predicated region
    $region14: #{tpu_custom_call.1} parent=1 // pred_check
      _
    $region15: #{tpu_custom_call.1} parent=1 // pred_check_branch
      %231 = sbr.rel (0) target = $region17
    $region16: #{tpu_custom_call.1} parent=1 // pred_region
      %s233 = ssub.s32 256, 256
      %234 = vsyncadd [#allocation5], %s233
      %s235 = sshll.u32 [#allocation4], 4
      %s236 = int_to_ptr.vmem [resolvable:$true] %s235
      %241 = dma.vmem_to_hbm [thread:$0]  %s236, 256, %s4, [#allocation5], 128, 128, 8
    $region17: #{tpu_custom_call.1} parent=1 // pred_fallthru
      _
    // Predicated region
    $region18: #{tpu_custom_call.1} parent=1 // pred_check
      _
    $region19: #{tpu_custom_call.1} parent=1 // pred_check_branch
      %243 = sbr.rel (0) target = $region21
    $region20: #{tpu_custom_call.1} parent=1 // pred_region
      %244 = dma.done [#allocation5], 256
    $region21: #{tpu_custom_call.1} parent=1 // pred_fallthru
      _
    %245 = vsyncpa [#allocation5], 1

</llo_original>
